<compile_context>
chip_gen: v5e
topology: v5e:2x2
jax: 0.10.0
libtpu: 0.0.40
codegen_flags: <defaults>
</compile_context>

<pallas_src>
import functools

import jax
import jax.numpy as jnp
from jax.experimental import pallas as pl
from jax.experimental.pallas import tpu as pltpu


def _residual_kernel(alpha_ref, lnbias_ref,          # SMEM scalars (1,)
                     x_ref, mask_ref, w_ref, b_ref,  # VMEM tiles
                     o_ref,                          # VMEM output tile
                     *, eps: float):
    x = x_ref[...].astype(jnp.float32)               # (TILE_M, D)
    d = x.shape[-1]

    # --- LayerNormalzation (exactly as the reference writes it) -------------
    mean = jnp.mean(x, axis=-1, keepdims=True)
    centered = x - mean
    var = jnp.sum(centered * centered, axis=-1, keepdims=True) * (1.0 / (d - 1))
    std = jnp.sqrt(var)                               # unbiased std (ddof=1)
    # NOTE: the reference divides only `mean` by (std + eps) — reproduced.
    inv = 1.0 / (std + eps)
    # TODO(synk): pl.reciprocal(std + eps, approx=True) to move the divide to
    # the EUP slot on real TPU runs (kept as a plain divide for portability).
    normed = alpha_ref[0] * (x - mean * inv) + lnbias_ref[0]

    # --- sublayer: Linear(D, D) on the MXU -----------------------------------
    y = jnp.dot(normed, w_ref[...], preferred_element_type=jnp.float32)
    y = y + b_ref[...]                                # b is (1, D), broadcasts

    # --- dropout: pre-scaled keep mask, one VPU multiply ---------------------
    y = y * mask_ref[...]

    # --- residual add ---------------------------------------------------------
    o_ref[...] = (x + y).astype(o_ref.dtype)


def residual_connection(x, w, b, alpha, ln_bias, *, p=0.1, eps=1e-6,
                        dropout_key=None, tile_m=512):
    """x: (B, S, D); w: (D, D); b: (D,); alpha, ln_bias: (1,).

    Dropout is training-mode (inverted scaling) when p > 0 and a dropout_key
    is given; otherwise it is the identity.
    """
    B, S, D = x.shape
    n = B * S
    x2 = x.reshape(n, D)
    b2 = b.reshape(1, D)

    if p > 0.0 and dropout_key is not None:
        keep = jax.random.bernoulli(dropout_key, 1.0 - p, (n, D))
        mask = keep.astype(jnp.float32) * (1.0 / (1.0 - p))
    else:
        mask = jnp.ones((n, D), jnp.float32)

    # Row tile: the largest multiple of the 8-row sublane tile that does not
    # exceed `tile_m` (or the whole array if it is smaller than one tile).
    tm = min(tile_m, n)
    if tm != n:
        tm = max(8, (tm // 8) * 8)
    grid = (pl.cdiv(n, tm),)

    kernel = functools.partial(_residual_kernel, eps=float(eps))
    out = pl.pallas_call(
        kernel,
        out_shape=jax.ShapeDtypeStruct((n, D), x.dtype),
        grid=grid,
        in_specs=[
            pl.BlockSpec(memory_space=pltpu.MemorySpace.SMEM),   # alpha (1,)
            pl.BlockSpec(memory_space=pltpu.MemorySpace.SMEM),   # ln bias (1,)
            pl.BlockSpec((tm, D), lambda i: (i, 0)),             # x tile
            pl.BlockSpec((tm, D), lambda i: (i, 0)),             # dropout mask tile
            pl.BlockSpec((D, D), lambda i: (0, 0)),              # weight, resident
            pl.BlockSpec((1, D), lambda i: (0, 0)),              # bias, resident
        ],
        out_specs=pl.BlockSpec((tm, D), lambda i: (i, 0)),
        compiler_params=pltpu.CompilerParams(
            # Row tiles are independent -> shard across TCs on v7x megacore.
            dimension_semantics=("parallel",),
            # Fits double-buffered (tm, D) tiles + a resident f32 weight up to
            # D ~ 2K; also within v7x's 64 MiB physical VMEM.
            vmem_limit_bytes=64 * 1024 * 1024,
        ),
        # TODO(synk): input_output_aliases={2: 0} to reuse the x HBM buffer for
        # the output once the surrounding graph donates x.
    )(alpha, ln_bias, x2, mask, w, b2)
    return out.reshape(B, S, D)


if __name__ == "__main__":
    key = jax.random.PRNGKey(0)
    kx, kw, kb, kd = jax.random.split(key, 4)

    # Small but lane-dense shapes: D is a multiple of 128.
    B, S, D = 2, 8, 128
    x = jax.random.normal(kx, (B, S, D), dtype=jnp.float32)

    # Deterministic synthetic parameters for the Linear sublayer + LN.
    w = jax.random.normal(kw, (D, D), dtype=jnp.float32) * (1.0 / jnp.sqrt(D))
    b = jax.random.normal(kb, (D,), dtype=jnp.float32) * 0.01
    alpha = jnp.ones((1,), dtype=jnp.float32)      # LayerNormalzation.alpha
    ln_bias = jnp.zeros((1,), dtype=jnp.float32)   # LayerNormalzation.bias

    out = residual_connection(x, w, b, alpha, ln_bias,
                              p=0.1, eps=1e-6, dropout_key=kd)
    jax.block_until_ready(out)
    assert out.shape == (B, S, D) and out.dtype == jnp.float32
    assert bool(jnp.all(jnp.isfinite(out)))
    print("KERNEL_OK")
</pallas_src>

<mosaic_0001>
module attributes {stable_mosaic.version = 11 : i64} {
  func.func @_residual_kernel(%arg0: i32, %arg1: memref<1xf32, #tpu.memory_space<smem>>, %arg2: memref<1xf32, #tpu.memory_space<smem>>, %arg3: memref<16x128xf32, #tpu.memory_space<vmem>>, %arg4: memref<16x128xf32, #tpu.memory_space<vmem>>, %arg5: memref<128x128xf32, #tpu.memory_space<vmem>>, %arg6: memref<1x128xf32, #tpu.memory_space<vmem>>, %arg7: memref<16x128xf32, #tpu.memory_space<vmem>>) attributes {dimension_semantics = [#tpu.dimension_semantics<parallel>], iteration_bounds = array<i64: 1>, scalar_prefetch = 0 : i64, scratch_operands = 0 : i64, tpu.core_type = #tpu.core_type<tc>, window_params = [{transform_indices = @transform_0, window_bounds = array<i64: 1>}, {transform_indices = @transform_1, window_bounds = array<i64: 1>}, {transform_indices = @transform_2, window_bounds = array<i64: 16, 128>}, {transform_indices = @transform_3, window_bounds = array<i64: 16, 128>}, {pipeline_mode = #tpu.pipeline_mode<synchronous>, transform_indices = @transform_4, window_bounds = array<i64: 128, 128>}, {pipeline_mode = #tpu.pipeline_mode<synchronous>, transform_indices = @transform_5, window_bounds = array<i64: 1, 128>}, {transform_indices = @transform_6, window_bounds = array<i64: 16, 128>}]} {
    %c0 = arith.constant 0 : index
    %c0_0 = arith.constant 0 : index
    %0 = vector.load %arg3[%c0, %c0_0] : memref<16x128xf32, #tpu.memory_space<vmem>>, vector<16x128xf32>
    %cst = arith.constant dense<0.000000e+00> : vector<16xf32>
    %1 = vector.multi_reduction <add>, %0, %cst [1] : vector<16x128xf32> to vector<16xf32>
    %2 = vector.shape_cast %1 : vector<16xf32> to vector<16x1xf32>
    %cst_1 = arith.constant 1.280000e+02 : f32
    %3 = vector.broadcast %cst_1 : f32 to vector<16x1xf32>
    %4 = arith.divf %2, %3 : vector<16x1xf32>
    %5 = vector.broadcast %4 : vector<16x1xf32> to vector<16x128xf32>
    %6 = arith.subf %0, %5 : vector<16x128xf32>
    %7 = arith.mulf %6, %6 : vector<16x128xf32>
    %cst_2 = arith.constant dense<0.000000e+00> : vector<16xf32>
    %8 = vector.multi_reduction <add>, %7, %cst_2 [1] : vector<16x128xf32> to vector<16xf32>
    %9 = vector.shape_cast %8 : vector<16xf32> to vector<16x1xf32>
    %cst_3 = arith.constant 0.00787401571 : f32
    %10 = vector.broadcast %cst_3 : f32 to vector<16x1xf32>
    %11 = arith.mulf %9, %10 : vector<16x1xf32>
    %12 = math.sqrt %11 : vector<16x1xf32>
    %cst_4 = arith.constant 9.99999997E-7 : f32
    %13 = vector.broadcast %cst_4 : f32 to vector<16x1xf32>
    %14 = arith.addf %12, %13 : vector<16x1xf32>
    %cst_5 = arith.constant 1.000000e+00 : f32
    %15 = vector.broadcast %cst_5 : f32 to vector<16x1xf32>
    %16 = arith.divf %15, %14 : vector<16x1xf32>
    %c0_6 = arith.constant 0 : index
    %17 = memref.load %arg1[%c0_6] : memref<1xf32, #tpu.memory_space<smem>>
    %18 = arith.mulf %4, %16 : vector<16x1xf32>
    %19 = vector.broadcast %18 : vector<16x1xf32> to vector<16x128xf32>
    %20 = arith.subf %0, %19 : vector<16x128xf32>
    %21 = vector.broadcast %17 : f32 to vector<16x128xf32>
    %22 = arith.mulf %21, %20 : vector<16x128xf32>
    %c0_7 = arith.constant 0 : index
    %23 = memref.load %arg2[%c0_7] : memref<1xf32, #tpu.memory_space<smem>>
    %24 = vector.broadcast %23 : f32 to vector<16x128xf32>
    %25 = arith.addf %22, %24 : vector<16x128xf32>
    %c0_8 = arith.constant 0 : index
    %c0_9 = arith.constant 0 : index
    %26 = vector.load %arg5[%c0_8, %c0_9] : memref<128x128xf32, #tpu.memory_space<vmem>>, vector<128x128xf32>
    %cst_10 = arith.constant dense<0.000000e+00> : vector<16x128xf32>
    %27 = tpu.matmul %25, %26, %cst_10 {dimension_numbers = #tpu.dot_dimension_numbers<[1], [0], [0], [1], [0, 0, 1, 1], [], []>} : vector<16x128xf32>, vector<128x128xf32>, vector<16x128xf32> -> vector<16x128xf32>
    %c0_11 = arith.constant 0 : index
    %c0_12 = arith.constant 0 : index
    %28 = vector.load %arg6[%c0_11, %c0_12] : memref<1x128xf32, #tpu.memory_space<vmem>>, vector<1x128xf32>
    %29 = vector.broadcast %28 : vector<1x128xf32> to vector<16x128xf32>
    %30 = arith.addf %27, %29 : vector<16x128xf32>
    %c0_13 = arith.constant 0 : index
    %c0_14 = arith.constant 0 : index
    %31 = vector.load %arg4[%c0_13, %c0_14] : memref<16x128xf32, #tpu.memory_space<vmem>>, vector<16x128xf32>
    %32 = arith.mulf %30, %31 : vector<16x128xf32>
    %33 = arith.addf %0, %32 : vector<16x128xf32>
    %c0_15 = arith.constant 0 : index
    %c0_16 = arith.constant 0 : index
    %34 = vector.load %arg7[%c0_15, %c0_16] : memref<16x128xf32, #tpu.memory_space<vmem>>, vector<16x128xf32>
    tpu.vector_store %arg7[%c0_15, %c0_16], %33 {strides = array<i32>} : memref<16x128xf32, #tpu.memory_space<vmem>>, vector<16x128xf32>,
    return
  }
  func.func @transform_0(%arg0: i32) -> i32 {
    %c0_i32 = arith.constant 0 : i32
    %c0_i32_0 = arith.constant 0 : i32
    return %c0_i32 : i32
  }
  func.func @transform_1(%arg0: i32) -> i32 {
    %c0_i32 = arith.constant 0 : i32
    %c0_i32_0 = arith.constant 0 : i32
    return %c0_i32 : i32
  }
  func.func @transform_2(%arg0: i32) -> (i32, i32) {
    %c0_i32 = arith.constant 0 : i32
    %c0_i32_0 = arith.constant 0 : i32
    return %arg0, %c0_i32 : i32, i32
  }
  func.func @transform_3(%arg0: i32) -> (i32, i32) {
    %c0_i32 = arith.constant 0 : i32
    %c0_i32_0 = arith.constant 0 : i32
    return %arg0, %c0_i32 : i32, i32
  }
  func.func @transform_4(%arg0: i32) -> (i32, i32) {
    %c0_i32 = arith.constant 0 : i32
    %c0_i32_0 = arith.constant 0 : i32
    %c0_i32_1 = arith.constant 0 : i32
    return %c0_i32, %c0_i32_0 : i32, i32
  }
  func.func @transform_5(%arg0: i32) -> (i32, i32) {
    %c0_i32 = arith.constant 0 : i32
    %c0_i32_0 = arith.constant 0 : i32
    %c0_i32_1 = arith.constant 0 : i32
    return %c0_i32, %c0_i32_0 : i32, i32
  }
  func.func @transform_6(%arg0: i32) -> (i32, i32) {
    %c0_i32 = arith.constant 0 : i32
    %c0_i32_0 = arith.constant 0 : i32
    return %arg0, %c0_i32 : i32, i32
  }
}

</mosaic_0001>

<llo_original>
// kernel: tpu_custom_call.1
$region0: #{tpu_custom_call.1}
  #allocation0 [shape = 'u32[]', space=smem, size = 0x4, offset = 0x4, fixed_abs, tag = 'smem constant byte address 0x4 - core index']
  #allocation1 [shape = 'u32[72,128]{1,0:T(1,128)}', space=vmem, size = 0x9000, scoped, tag = 'internal scratch']
  #allocation2 [shape = 'f32[1]{0:T(128)S(6)}', space=smem, size = 0x200, scoped, tag = 'scoped memory for tpu_custom_call.1']
  #allocation3 [shape = 'f32[1]{0:T(128)S(6)}', space=smem, size = 0x200, scoped, tag = 'scoped memory for tpu_custom_call.1']
  %s0 = inlined_call_operand.<no memory space> [shape: f32[1], index: 0, kind: input, shape index: {}]
  %s1 = inlined_call_operand.<no memory space> [shape: f32[1], index: 1, kind: input, shape index: {}]
  %s2 = inlined_call_operand.hbm [shape: f32[16,128], index: 2, kind: input, shape index: {}]
  %s3 = inlined_call_operand.hbm [shape: f32[16,128], index: 3, kind: input, shape index: {}]
  %s4 = inlined_call_operand.hbm [shape: f32[128,128], index: 4, kind: input, shape index: {}]
  %s5 = inlined_call_operand.vmem [shape: f32[1,128], index: 5, kind: input, shape index: {}]
  %s6 = inlined_call_operand.hbm [shape: f32[16,128], index: 6, kind: output, shape index: {}]
  %s7 = sld [smem:[#allocation0]]
  $region46: #{tpu_custom_call.1} parent=0
    _
  %s9 = ssub.s32 1, %s7
  %s10 = scalar_select 0, %s9, %s7
  %11 = sst [smem:[#allocation2]] %s0
  %12 = sst [smem:[#allocation3]] %s1
  $region1: #{tpu_custom_call.1} parent=0
    #allocation4 [shape = 'u8[8192]{0}', space=vmem, size = 0x2000, scoped, tag = 'input window, operand 2, single buffered']
    #allocation5 [shape = 's32[1]{0}', space=sflag, size = 0x4, scoped, tag = 'scoped memory for tpu_custom_call.1']
    #allocation6 [shape = 's32[1]{0}', space=sflag, size = 0x4, scoped, tag = 'scoped memory for tpu_custom_call.1']
    #allocation7 [shape = 'u8[8192]{0}', space=vmem, size = 0x2000, scoped, tag = 'input window, operand 3, single buffered']
    #allocation8 [shape = 's32[1]{0}', space=sflag, size = 0x4, scoped, tag = 'scoped memory for tpu_custom_call.1']
    #allocation9 [shape = 'u8[65536]{0}', space=vmem, size = 0x10000, scoped, tag = 'input window, operand 4, single buffered']
    #allocation10 [shape = 'u8[8192]{0}', space=vmem, size = 0x2000, scoped, tag = 'output window, operand 0, single buffered']
    %13 = vsyncpa [#allocation5], 0
    %14 = vsyncpa [#allocation8], 0
    %15 = vsyncpa [#allocation6], 0
    // Predicated region
    $region2: #{tpu_custom_call.1} parent=1 // pred_check
      _
    $region3: #{tpu_custom_call.1} parent=1 // pred_check_branch
      %17 = sbr.rel (0) target = $region5
    $region4: #{tpu_custom_call.1} parent=1 // pred_region
      _
    $region5: #{tpu_custom_call.1} parent=1 // pred_fallthru
      _
    // Predicated region
    $region6: #{tpu_custom_call.1} parent=1 // pred_check
      _
    $region7: #{tpu_custom_call.1} parent=1 // pred_check_branch
      %19 = sbr.rel (0) target = $region9
    $region8: #{tpu_custom_call.1} parent=1 // pred_region
      _
    $region9: #{tpu_custom_call.1} parent=1 // pred_fallthru
      _
    // Predicated region
    $region10: #{tpu_custom_call.1} parent=1 // pred_check
      _
    $region11: #{tpu_custom_call.1} parent=1 // pred_check_branch
      %21 = sbr.rel (0) target = $region13
    $region12: #{tpu_custom_call.1} parent=1 // pred_region
      %23 = vsyncadd [#allocation5], 0
      %s24 = sshll.u32 %s2, 4
      %s25 = int_to_ptr.hbm [resolvable:$true] %s24
      %s26 = sshll.u32 [#allocation4], 4
      %s27 = int_to_ptr.vmem [resolvable:$true] %s26
      %32 = dma.hbm_to_vmem [thread:$0]  %s25, 256, %s27, [#allocation5], 128, 128, 8
    $region13: #{tpu_custom_call.1} parent=1 // pred_fallthru
      _
    // Predicated region
    $region14: #{tpu_custom_call.1} parent=1 // pred_check
      _
    $region15: #{tpu_custom_call.1} parent=1 // pred_check_branch
      %34 = sbr.rel (0) target = $region17
    $region16: #{tpu_custom_call.1} parent=1 // pred_region
      %36 = vsyncadd [#allocation8], 0
      %s37 = sshll.u32 %s3, 4
      %s38 = int_to_ptr.hbm [resolvable:$true] %s37
      %s39 = sshll.u32 [#allocation7], 4
      %s40 = int_to_ptr.vmem [resolvable:$true] %s39
      %45 = dma.hbm_to_vmem [thread:$0]  %s38, 256, %s40, [#allocation8], 128, 128, 8
    $region17: #{tpu_custom_call.1} parent=1 // pred_fallthru
      _
    // Predicated region
    $region18: #{tpu_custom_call.1} parent=1 // pred_check
      _
    $region19: #{tpu_custom_call.1} parent=1 // pred_check_branch
      %47 = sbr.rel (0) target = $region21
    $region20: #{tpu_custom_call.1} parent=1 // pred_region
      %49 = vsyncadd [#allocation8], 0
      %s50 = sshll.u32 %s4, 4
      %s51 = int_to_ptr.hbm [resolvable:$true] %s50
      %s52 = sshll.u32 [#allocation9], 4
      %s53 = int_to_ptr.vmem [resolvable:$true] %s52
      %58 = dma.hbm_to_vmem [thread:$0]  %s51, 2048, %s53, [#allocation8], 128, 128, 8
    $region21: #{tpu_custom_call.1} parent=1 // pred_fallthru
      _
    // Predicated region
    $region22: #{tpu_custom_call.1} parent=1 // pred_check
      _
    $region23: #{tpu_custom_call.1} parent=1 // pred_check_branch
      %60 = sbr.rel (0) target = $region25
    $region24: #{tpu_custom_call.1} parent=1 // pred_region
      _
    $region25: #{tpu_custom_call.1} parent=1 // pred_fallthru
      _
    // Predicated region
    $region26: #{tpu_custom_call.1} parent=1 // pred_check
      _
    $region27: #{tpu_custom_call.1} parent=1 // pred_check_branch
      %62 = sbr.rel (0) target = $region29
    $region28: #{tpu_custom_call.1} parent=1 // pred_region
      %64 = dma.done [#allocation5], 256
    $region29: #{tpu_custom_call.1} parent=1 // pred_fallthru
      _
    // Predicated region
    $region30: #{tpu_custom_call.1} parent=1 // pred_check
      _
    $region31: #{tpu_custom_call.1} parent=1 // pred_check_branch
      %66 = sbr.rel (0) target = $region33
    $region32: #{tpu_custom_call.1} parent=1 // pred_region
      %68 = dma.done [#allocation8], 256
    $region33: #{tpu_custom_call.1} parent=1 // pred_fallthru
      _
    // Predicated region
    $region34: #{tpu_custom_call.1} parent=1 // pred_check
      _
    $region35: #{tpu_custom_call.1} parent=1 // pred_check_branch
      %70 = sbr.rel (0) target = $region37
    $region36: #{tpu_custom_call.1} parent=1 // pred_region
      %72 = dma.done [#allocation8], 2048
    $region37: #{tpu_custom_call.1} parent=1 // pred_fallthru
      _
    %v73 = vld [vmem:[#allocation4] sm:$0xff]
    %v74 = vld [vmem:[#allocation4 + $0x8] sm:$0xff]
    %75 = vadd.xlane.f32.xlu0 %v73
    %v76 = vpop.xlane.xlu0 %75
    %77 = vadd.xlane.f32.xlu0 %v74
    %v78 = vpop.xlane.xlu0 %77
    %v79 = vrcp.pop 128.0
    %v80 = vmul.f32 128.0, %v79
    %v81 = vsub.f32 1.0, %v80
    %v82 = vmul.f32 %v79, %v81
    %v83 = vadd.f32 %v79, %v82
    %vm84 = vweird.f32 %v79
    %v85 = vsel %vm84, %v79, %v83
    %v86 = vmul.f32 %v76, %v85
    %v87 = vmul.f32 %v78, %v85
    %v88 = vsub.f32 %v73, %v86
    %v89 = vsub.f32 %v74, %v87
    %v90 = vmul.f32 %v88, %v88
    %v91 = vmul.f32 %v89, %v89
    %92 = vadd.xlane.f32.xlu0 %v90
    %v93 = vpop.xlane.xlu0 %92
    %94 = vadd.xlane.f32.xlu0 %v91
    %v95 = vpop.xlane.xlu0 %94
    %v96 = vmul.f32 %v93, 0.007874016
    %v97 = vmul.f32 %v95, 0.007874016
    %v98 = vrsqrt.pop %v96
    %v99 = vmul.f32 %v98, %v96
    %v100 = vmul.f32 %v99, %v98
    %v101 = vmul.f32 0.5, %v100
    %v102 = vsub.f32 1.5, %v101
    %v103 = vmul.f32 %v98, %v102
    %v104 = vmul.f32 %v96, %v103
    %vm105 = vcmp.eq.f32.partialorder %v96, inf
    %v106 = vsel %vm105, %v96, %v104
    %vm107 = vcmp.eq.f32.partialorder %v96, 0.0
    %v108 = vand.u32 %v96, 2147483648
    %v109 = vsel %vm107, %v108, %v106
    %v110 = vrsqrt.pop %v97
    %v111 = vmul.f32 %v110, %v97
    %v112 = vmul.f32 %v111, %v110
    %v113 = vmul.f32 0.5, %v112
    %v114 = vsub.f32 1.5, %v113
    %v115 = vmul.f32 %v110, %v114
    %v116 = vmul.f32 %v97, %v115
    %vm117 = vcmp.eq.f32.partialorder %v97, inf
    %v118 = vsel %vm117, %v97, %v116
    %vm119 = vcmp.eq.f32.partialorder %v97, 0.0
    %v120 = vand.u32 %v97, 2147483648
    %v121 = vsel %vm119, %v120, %v118
    %v122 = vadd.f32 %v109, 1e-06
    %v123 = vadd.f32 %v121, 1e-06
    %v124 = vrcp.pop %v122
    %v125 = vmul.f32 %v122, %v124
    %v126 = vsub.f32 1.0, %v125
    %v127 = vmul.f32 %v124, %v126
    %v128 = vadd.f32 %v124, %v127
    %vm129 = vweird.f32 %v122
    %vm130 = vweird.f32 %v124
    %vm131 = vmor %vm129, %vm130
    %v132 = vsel %vm131, %v124, %v128
    %v133 = vand.u32 2147483647, %v122
    %vm134 = vcmp.eq.f32.partialorder %v133, 8.507059e+37
    %v135 = vand.u32 %v122, 2147483648
    %v136 = vor.u32 1.1754944e-38, %v135
    %v137 = vsel %vm134, %v136, %v132
    %v138 = vmul.f32 1.0, %v137
    %v139 = vrcp.pop %v123
    %v140 = vmul.f32 %v123, %v139
    %v141 = vsub.f32 1.0, %v140
    %v142 = vmul.f32 %v139, %v141
    %v143 = vadd.f32 %v139, %v142
    %vm144 = vweird.f32 %v123
    %vm145 = vweird.f32 %v139
    %vm146 = vmor %vm144, %vm145
    %v147 = vsel %vm146, %v139, %v143
    %v148 = vand.u32 2147483647, %v123
    %vm149 = vcmp.eq.f32.partialorder %v148, 8.507059e+37
    %v150 = vand.u32 %v123, 2147483648
    %v151 = vor.u32 1.1754944e-38, %v150
    %v152 = vsel %vm149, %v151, %v147
    %v153 = vmul.f32 1.0, %v152
    %s154 = sld [smem:[#allocation2]]
    %v155 = vmul.f32 %v86, %v138
    %v156 = vmul.f32 %v87, %v153
    %v157 = vsub.f32 %v73, %v155
    %v158 = vsub.f32 %v74, %v156
    %v159 = vstv %s154
    %v160 = vmul.f32 %v159, %v157
    %v161 = vmul.f32 %v159, %v158
    %s162 = sld [smem:[#allocation3]]
    %v163 = vstv %s162
    %v164 = vadd.f32 %v160, %v163
    %v165 = vadd.f32 %v161, %v163
    %v166 = vld [vmem:[#allocation9] sm:$0xff]
    %v167 = vld [vmem:[#allocation9 + $0x8] sm:$0xff]
    %v168 = vld [vmem:[#allocation9 + $0x10] sm:$0xff]
    %v169 = vld [vmem:[#allocation9 + $0x18] sm:$0xff]
    %v170 = vld [vmem:[#allocation9 + $0x20] sm:$0xff]
    %v171 = vld [vmem:[#allocation9 + $0x28] sm:$0xff]
    %v172 = vld [vmem:[#allocation9 + $0x30] sm:$0xff]
    %v173 = vld [vmem:[#allocation9 + $0x38] sm:$0xff]
    %v174 = vld [vmem:[#allocation9 + $0x40] sm:$0xff]
    %v175 = vld [vmem:[#allocation9 + $0x48] sm:$0xff]
    %v176 = vld [vmem:[#allocation9 + $0x50] sm:$0xff]
    %v177 = vld [vmem:[#allocation9 + $0x58] sm:$0xff]
    %v178 = vld [vmem:[#allocation9 + $0x60] sm:$0xff]
    %v179 = vld [vmem:[#allocation9 + $0x68] sm:$0xff]
    %v180 = vld [vmem:[#allocation9 + $0x70] sm:$0xff]
    %v181 = vld [vmem:[#allocation9 + $0x78] sm:$0xff]
    %v182 = vld [vmem:[%s5] sm:$0x1]
    %v184 = vperm.slane %v182, 0
    %186 = vmatpush.msra.mxu0 %v181
    %187 = vmatpush.msra.mxu0 %v180
    %188 = vmatpush.msra.mxu0 %v179
    %189 = vmatpush.msra.mxu0 %v178
    %190 = vmatpush.msra.mxu0 %v177
    %191 = vmatpush.msra.mxu0 %v176
    %192 = vmatpush.msra.mxu0 %v175
    %193 = vmatpush.msra.mxu0 %v174
    %194 = vmatpush.msra.mxu0 %v173
    %195 = vmatpush.msra.mxu0 %v172
    %196 = vmatpush.msra.mxu0 %v171
    %197 = vmatpush.msra.mxu0 %v170
    %198 = vmatpush.msra.mxu0 %v169
    %199 = vmatpush.msra.mxu0 %v168
    %200 = vmatpush.msra.mxu0 %v167
    %201 = vmatpush.msra.mxu0 %v166
    %202 = vmatmul.f32.gmra.mxu0 %v164
    %v203 = vpop.f32.mrf.mxu0
    %v204 = vadd.f32 %v184, %v203
    %205 = vmatmul.f32.gmra.mxu0 %v165
    %v206 = vpop.f32.mrf.mxu0
    %v207 = vadd.f32 %v184, %v206
    %208 = vdwg.mxu0
    %v209 = vld [vmem:[#allocation7] sm:$0xff]
    %v210 = vld [vmem:[#allocation7 + $0x8] sm:$0xff]
    %v211 = vmul.f32 %v204, %v209
    %v212 = vmul.f32 %v207, %v210
    %v213 = vadd.f32 %v73, %v211
    %v214 = vadd.f32 %v74, %v212
    %215 = vst [vmem:[#allocation10] sm:$0xff] %v213
    %216 = vst [vmem:[#allocation10 + $0x8] sm:$0xff] %v214
    // Predicated region
    $region38: #{tpu_custom_call.1} parent=1 // pred_check
      _
    $region39: #{tpu_custom_call.1} parent=1 // pred_check_branch
      %218 = sbr.rel (0) target = $region41
    $region40: #{tpu_custom_call.1} parent=1 // pred_region
      %220 = vsyncadd [#allocation6], 0
      %s221 = sshll.u32 [#allocation10], 4
      %s222 = int_to_ptr.vmem [resolvable:$true] %s221
      %s223 = sshll.u32 %s6, 4
      %s224 = int_to_ptr.hbm [resolvable:$true] %s223
      %229 = dma.vmem_to_hbm [thread:$0]  %s222, 256, %s224, [#allocation6], 128, 128, 8
    $region41: #{tpu_custom_call.1} parent=1 // pred_fallthru
      _
    // Predicated region
    $region42: #{tpu_custom_call.1} parent=1 // pred_check
      _
    $region43: #{tpu_custom_call.1} parent=1 // pred_check_branch
      %231 = sbr.rel (0) target = $region45
    $region44: #{tpu_custom_call.1} parent=1 // pred_region
      %233 = dma.done [#allocation6], 256
    $region45: #{tpu_custom_call.1} parent=1 // pred_fallthru
      _
    %234 = vsyncpa [#allocation5], 1
    %235 = vsyncpa [#allocation8], 1
    %236 = vsyncpa [#allocation6], 1

</llo_original>
